<compile_context>
chip_gen: v7x
topology: tpu7x:2x2x1
jax: 0.10.0
libtpu: 0.0.40
codegen_flags: <defaults>
</compile_context>

<pallas_src>
import functools

import jax
import jax.numpy as jnp
from jax.experimental import pallas as pl
from jax.experimental.pallas import tpu as pltpu

HIDDEN = 100          # matches nn.Linear(state_size, 100) etc.
H_PAD = 128           # lane-dense padded hidden width
NEG_SLOPE = 0.01      # F.leaky_relu default negative_slope


def _leaky_relu(x):
    # mul + max (2 VALU issues/elem) instead of cmp + select + mul (3).
    return jnp.maximum(x, NEG_SLOPE * x)


def _round_up(n, m):
    return m * pl.cdiv(n, m)


# ---------------------------------------------------------------------------
# Kernel: one batch tile per grid step, all weights VMEM-resident.
# ---------------------------------------------------------------------------
def critic_kernel(state_ref, action_ref,        # (TB, S), (TB, A)
                  w1_ref, w2_ref, b12_ref,      # (S,2H), (A,2H) bf16; (1,2H) f32
                  w3_ref, b3_ref,               # (2H, H) bf16; (1, H) f32
                  w4_ref, b4_ref,               # (1, H) f32; (1, 1) f32
                  q_ref):                       # (TB, 1) f32
    # Cast streamed activations to bf16 in-kernel so the MXU runs native bf16
    # (f32 accumulation via preferred_element_type).
    s = state_ref[...].astype(jnp.bfloat16)
    a = action_ref[...].astype(jnp.bfloat16)

    # Fused layers 1+2 with no concat anywhere:
    # [hs | 0 | ha | 0] = leaky_relu(state @ W1p + action @ W2p + b12)
    h12 = (jnp.dot(s, w1_ref[...], preferred_element_type=jnp.float32)
           + jnp.dot(a, w2_ref[...], preferred_element_type=jnp.float32)
           + b12_ref[...])
    h12 = _leaky_relu(h12)                      # f32, (TB, 2*H_PAD)

    # Layer 3 (padded rows of W3 are zero / padded cols of h12 are zero).
    h = jnp.dot(h12.astype(jnp.bfloat16), w3_ref[...],
                preferred_element_type=jnp.float32) + b3_ref[...]
    h = _leaky_relu(h)                          # f32, (TB, H_PAD)

    # Final (H_PAD -> 1) projection on the VPU/XLU instead of a wasteful
    # 1-column MXU pass: q = sum(h * w4_row) + b4.
    q_ref[...] = jnp.sum(h * w4_ref[...], axis=-1, keepdims=True) + b4_ref[...]


# ---------------------------------------------------------------------------
# One-time parameter preparation (transpose / pad / dtype).  Call ONCE.
# ---------------------------------------------------------------------------
def prepare_params(params, state_size, action_size):
    """Torch-layout params -> kernel-layout params (bf16 MXU weights)."""
    w1, b1, w2, b2, w3, b3, w4, b4 = params
    S, A = state_size, action_size
    f32, bf16 = jnp.float32, jnp.bfloat16

    # Layer 1 / 2 projected into the [hs | pad | ha | pad] slab layout.
    w1p = jnp.zeros((S, 2 * H_PAD), f32).at[:, :HIDDEN].set(w1.T.astype(f32))
    w2p = jnp.zeros((A, 2 * H_PAD), f32).at[:, H_PAD:H_PAD + HIDDEN].set(
        w2.T.astype(f32))
    b12 = jnp.zeros((1, 2 * H_PAD), f32)
    b12 = b12.at[0, :HIDDEN].set(b1.astype(f32))
    b12 = b12.at[0, H_PAD:H_PAD + HIDDEN].set(b2.astype(f32))

    # Layer 3, rows aligned with the slab layout.
    w3t = w3.T.astype(f32)                          # (200, 100)
    w3p = jnp.zeros((2 * H_PAD, H_PAD), f32)
    w3p = w3p.at[:HIDDEN, :HIDDEN].set(w3t[:HIDDEN])
    w3p = w3p.at[H_PAD:H_PAD + HIDDEN, :HIDDEN].set(w3t[HIDDEN:])
    b3p = jnp.zeros((1, H_PAD), f32).at[0, :HIDDEN].set(b3.astype(f32))

    # Final projection as a broadcast row (stays f32: it runs on the VPU).
    w4row = jnp.zeros((1, H_PAD), f32).at[0, :HIDDEN].set(
        w4.reshape(-1).astype(f32))
    b4s = b4.reshape(1, 1).astype(f32)

    # MXU-feeding weights stored bf16 (native MXU dtype, half the DMA/VMEM).
    return (w1p.astype(bf16), w2p.astype(bf16), b12,
            w3p.astype(bf16), b3p, w4row, b4s)


# ---------------------------------------------------------------------------
# Forward wrapper: batch-tiled pallas_call, zero wrapper-side data movement.
# ---------------------------------------------------------------------------
def critic_forward(state, action, prepared, *, tile_b=2048):
    """state: [B, S], action: [B, A] -> q: [B, 1] (float32)."""
    w1p, w2p, b12, w3p, b3p, w4row, b4s = prepared
    B, S = state.shape
    A = action.shape[1]

    # Batch tile: multiple of 8 sublanes, capped at tile_b, and chosen so the
    # grid has >= 2 steps when B is large enough (both v7x TensorCores get
    # work through the "parallel" grid axis).
    half = _round_up(pl.cdiv(B, 2), 8)
    tb = int(max(8, min(tile_b, half)))
    grid = (pl.cdiv(B, tb),)          # ragged last block: no jnp.pad needed

    q = pl.pallas_call(
        critic_kernel,
        out_shape=jax.ShapeDtypeStruct((B, 1), jnp.float32),
        grid=grid,
        in_specs=[
            pl.BlockSpec((tb, S), lambda i: (i, 0)),          # batch-tiled
            pl.BlockSpec((tb, A), lambda i: (i, 0)),          # batch-tiled
            pl.BlockSpec(w1p.shape, lambda i: (0, 0)),        # resident weights
            pl.BlockSpec(w2p.shape, lambda i: (0, 0)),
            pl.BlockSpec(b12.shape, lambda i: (0, 0)),
            pl.BlockSpec(w3p.shape, lambda i: (0, 0)),
            pl.BlockSpec(b3p.shape, lambda i: (0, 0)),
            pl.BlockSpec(w4row.shape, lambda i: (0, 0)),
            pl.BlockSpec(b4s.shape, lambda i: (0, 0)),
        ],
        out_specs=pl.BlockSpec((tb, 1), lambda i: (i, 0)),
        compiler_params=pltpu.CompilerParams(
            dimension_semantics=("parallel",),                # megacore on v7x
            vmem_limit_bytes=48 * 1024 * 1024),               # headroom for big tiles
    )(state, action, w1p, w2p, b12, w3p, b3p, w4row, b4s)

    return q


# ---------------------------------------------------------------------------
# Torch-equivalent init + plain-JAX reference.
# ---------------------------------------------------------------------------
def init_params(key, state_size, action_size):
    """Mimics torch.nn.Linear default init (uniform +-1/sqrt(fan_in))."""
    def linear(key, out_f, in_f):
        kw, kb = jax.random.split(key)
        bound = 1.0 / jnp.sqrt(jnp.float32(in_f))
        w = jax.random.uniform(kw, (out_f, in_f), jnp.float32, -bound, bound)
        b = jax.random.uniform(kb, (out_f,), jnp.float32, -bound, bound)
        return w, b

    k1, k2, k3, k4 = jax.random.split(key, 4)
    w1, b1 = linear(k1, HIDDEN, state_size)        # net_state
    w2, b2 = linear(k2, HIDDEN, action_size)       # net_action
    w3, b3 = linear(k3, HIDDEN, 2 * HIDDEN)        # net_layer
    w4, b4 = linear(k4, 1, HIDDEN)                 # q_value
    return (w1, b1, w2, b2, w3, b3, w4, b4)


def critic_reference(state, action, params):
    (w1, b1, w2, b2, w3, b3, w4, b4) = params
    hs = _leaky_relu(state @ w1.T + b1)
    ha = _leaky_relu(action @ w2.T + b2)
    h = _leaky_relu(jnp.concatenate([hs, ha], axis=1) @ w3.T + b3)
    return h @ w4.T + b4


if __name__ == "__main__":
    key = jax.random.PRNGKey(0)
    k_params, k_state, k_action = jax.random.split(key, 3)

    batch = 8
    state_size = 16
    action_size = 8

    params = init_params(k_params, state_size, action_size)
    prepared = prepare_params(params, state_size, action_size)   # hoisted prep

    state = jax.random.normal(k_state, (batch, state_size), jnp.float32)
    action = jax.random.normal(k_action, (batch, action_size), jnp.float32)

    fwd = jax.jit(functools.partial(critic_forward, prepared=prepared))
    q = jax.block_until_ready(fwd(state, action))

    q_ref = critic_reference(state, action, params)
    assert q.shape == (batch, 1)
    # bf16 MXU operands (with f32 accumulation) -> loosened tolerance vs the
    # pure-f32 reference, per the review's correctness note.
    assert jnp.allclose(q, q_ref, atol=5e-2, rtol=5e-2), (q, q_ref)

    print("KERNEL_OK")
</pallas_src>

<mosaic_0001>
module attributes {stable_mosaic.version = 11 : i64} {
  func.func @critic_kernel(%arg0: i32, %arg1: memref<8x16xf32, #tpu.memory_space<vmem>>, %arg2: memref<8x8xf32, #tpu.memory_space<vmem>>, %arg3: memref<16x256xbf16, #tpu.memory_space<vmem>>, %arg4: memref<8x256xbf16, #tpu.memory_space<vmem>>, %arg5: memref<1x256xf32, #tpu.memory_space<vmem>>, %arg6: memref<256x128xbf16, #tpu.memory_space<vmem>>, %arg7: memref<1x128xf32, #tpu.memory_space<vmem>>, %arg8: memref<1x128xf32, #tpu.memory_space<vmem>>, %arg9: memref<1x1xf32, #tpu.memory_space<vmem>>, %arg10: memref<8x1xf32, #tpu.memory_space<vmem>>) attributes {dimension_semantics = [#tpu.dimension_semantics<parallel>], iteration_bounds = array<i64: 1>, scalar_prefetch = 0 : i64, scratch_operands = 0 : i64, tpu.core_type = #tpu.core_type<tc>, window_params = [{transform_indices = @transform_0, window_bounds = array<i64: 8, 16>}, {transform_indices = @transform_1, window_bounds = array<i64: 8, 8>}, {pipeline_mode = #tpu.pipeline_mode<synchronous>, transform_indices = @transform_2, window_bounds = array<i64: 16, 256>}, {pipeline_mode = #tpu.pipeline_mode<synchronous>, transform_indices = @transform_3, window_bounds = array<i64: 8, 256>}, {pipeline_mode = #tpu.pipeline_mode<synchronous>, transform_indices = @transform_4, window_bounds = array<i64: 1, 256>}, {pipeline_mode = #tpu.pipeline_mode<synchronous>, transform_indices = @transform_5, window_bounds = array<i64: 256, 128>}, {pipeline_mode = #tpu.pipeline_mode<synchronous>, transform_indices = @transform_6, window_bounds = array<i64: 1, 128>}, {pipeline_mode = #tpu.pipeline_mode<synchronous>, transform_indices = @transform_7, window_bounds = array<i64: 1, 128>}, {pipeline_mode = #tpu.pipeline_mode<synchronous>, transform_indices = @transform_8, window_bounds = array<i64: 1, 1>}, {transform_indices = @transform_9, window_bounds = array<i64: 8, 1>}]} {
    %c0 = arith.constant 0 : index
    %c0_0 = arith.constant 0 : index
    %0 = vector.load %arg1[%c0, %c0_0] : memref<8x16xf32, #tpu.memory_space<vmem>>, vector<8x16xf32>
    %1 = arith.truncf %0 : vector<8x16xf32> to vector<8x16xbf16>
    %c0_1 = arith.constant 0 : index
    %c0_2 = arith.constant 0 : index
    %2 = vector.load %arg2[%c0_1, %c0_2] : memref<8x8xf32, #tpu.memory_space<vmem>>, vector<8x8xf32>
    %3 = arith.truncf %2 : vector<8x8xf32> to vector<8x8xbf16>
    %c0_3 = arith.constant 0 : index
    %c0_4 = arith.constant 0 : index
    %4 = vector.load %arg3[%c0_3, %c0_4] : memref<16x256xbf16, #tpu.memory_space<vmem>>, vector<16x256xbf16>
    %cst = arith.constant dense<0.000000e+00> : vector<8x256xf32>
    %5 = tpu.matmul %1, %4, %cst {dimension_numbers = #tpu.dot_dimension_numbers<[1], [0], [0], [1], [0, 0, 1, 1], [], []>} : vector<8x16xbf16>, vector<16x256xbf16>, vector<8x256xf32> -> vector<8x256xf32>
    %c0_5 = arith.constant 0 : index
    %c0_6 = arith.constant 0 : index
    %6 = vector.load %arg4[%c0_5, %c0_6] : memref<8x256xbf16, #tpu.memory_space<vmem>>, vector<8x256xbf16>
    %cst_7 = arith.constant dense<0.000000e+00> : vector<8x256xf32>
    %7 = tpu.matmul %3, %6, %cst_7 {dimension_numbers = #tpu.dot_dimension_numbers<[1], [0], [0], [1], [0, 0, 1, 1], [], []>} : vector<8x8xbf16>, vector<8x256xbf16>, vector<8x256xf32> -> vector<8x256xf32>
    %8 = arith.addf %5, %7 : vector<8x256xf32>
    %c0_8 = arith.constant 0 : index
    %c0_9 = arith.constant 0 : index
    %9 = vector.load %arg5[%c0_8, %c0_9] : memref<1x256xf32, #tpu.memory_space<vmem>>, vector<1x256xf32>
    %10 = vector.broadcast %9 : vector<1x256xf32> to vector<8x256xf32>
    %11 = arith.addf %8, %10 : vector<8x256xf32>
    %cst_10 = arith.constant 0.00999999977 : f32
    %12 = vector.broadcast %cst_10 : f32 to vector<8x256xf32>
    %13 = arith.mulf %12, %11 : vector<8x256xf32>
    %14 = arith.maximumf %11, %13 : vector<8x256xf32>
    %15 = arith.truncf %14 : vector<8x256xf32> to vector<8x256xbf16>
    %c0_11 = arith.constant 0 : index
    %c0_12 = arith.constant 0 : index
    %16 = vector.load %arg6[%c0_11, %c0_12] : memref<256x128xbf16, #tpu.memory_space<vmem>>, vector<256x128xbf16>
    %cst_13 = arith.constant dense<0.000000e+00> : vector<8x128xf32>
    %17 = tpu.matmul %15, %16, %cst_13 {dimension_numbers = #tpu.dot_dimension_numbers<[1], [0], [0], [1], [0, 0, 1, 1], [], []>} : vector<8x256xbf16>, vector<256x128xbf16>, vector<8x128xf32> -> vector<8x128xf32>
    %c0_14 = arith.constant 0 : index
    %c0_15 = arith.constant 0 : index
    %18 = vector.load %arg7[%c0_14, %c0_15] : memref<1x128xf32, #tpu.memory_space<vmem>>, vector<1x128xf32>
    %19 = vector.broadcast %18 : vector<1x128xf32> to vector<8x128xf32>
    %20 = arith.addf %17, %19 : vector<8x128xf32>
    %cst_16 = arith.constant 0.00999999977 : f32
    %21 = vector.broadcast %cst_16 : f32 to vector<8x128xf32>
    %22 = arith.mulf %21, %20 : vector<8x128xf32>
    %23 = arith.maximumf %20, %22 : vector<8x128xf32>
    %c0_17 = arith.constant 0 : index
    %c0_18 = arith.constant 0 : index
    %24 = vector.load %arg8[%c0_17, %c0_18] : memref<1x128xf32, #tpu.memory_space<vmem>>, vector<1x128xf32>
    %25 = vector.broadcast %24 : vector<1x128xf32> to vector<8x128xf32>
    %26 = arith.mulf %23, %25 : vector<8x128xf32>
    %cst_19 = arith.constant dense<0.000000e+00> : vector<8xf32>
    %27 = vector.multi_reduction <add>, %26, %cst_19 [1] : vector<8x128xf32> to vector<8xf32>
    %28 = vector.shape_cast %27 : vector<8xf32> to vector<8x1xf32>
    %c0_20 = arith.constant 0 : index
    %c0_21 = arith.constant 0 : index
    %29 = vector.load %arg9[%c0_20, %c0_21] : memref<1x1xf32, #tpu.memory_space<vmem>>, vector<1x1xf32>
    %30 = vector.broadcast %29 : vector<1x1xf32> to vector<8x1xf32>
    %31 = arith.addf %28, %30 : vector<8x1xf32>
    %c0_22 = arith.constant 0 : index
    %c0_23 = arith.constant 0 : index
    %32 = vector.load %arg10[%c0_22, %c0_23] : memref<8x1xf32, #tpu.memory_space<vmem>>, vector<8x1xf32>
    tpu.vector_store %arg10[%c0_22, %c0_23], %31 {strides = array<i32>} : memref<8x1xf32, #tpu.memory_space<vmem>>, vector<8x1xf32>,
    return
  }
  func.func @transform_0(%arg0: i32) -> (i32, i32) {
    %c0_i32 = arith.constant 0 : i32
    %c0_i32_0 = arith.constant 0 : i32
    return %arg0, %c0_i32 : i32, i32
  }
  func.func @transform_1(%arg0: i32) -> (i32, i32) {
    %c0_i32 = arith.constant 0 : i32
    %c0_i32_0 = arith.constant 0 : i32
    return %arg0, %c0_i32 : i32, i32
  }
  func.func @transform_2(%arg0: i32) -> (i32, i32) {
    %c0_i32 = arith.constant 0 : i32
    %c0_i32_0 = arith.constant 0 : i32
    %c0_i32_1 = arith.constant 0 : i32
    return %c0_i32, %c0_i32_0 : i32, i32
  }
  func.func @transform_3(%arg0: i32) -> (i32, i32) {
    %c0_i32 = arith.constant 0 : i32
    %c0_i32_0 = arith.constant 0 : i32
    %c0_i32_1 = arith.constant 0 : i32
    return %c0_i32, %c0_i32_0 : i32, i32
  }
  func.func @transform_4(%arg0: i32) -> (i32, i32) {
    %c0_i32 = arith.constant 0 : i32
    %c0_i32_0 = arith.constant 0 : i32
    %c0_i32_1 = arith.constant 0 : i32
    return %c0_i32, %c0_i32_0 : i32, i32
  }
  func.func @transform_5(%arg0: i32) -> (i32, i32) {
    %c0_i32 = arith.constant 0 : i32
    %c0_i32_0 = arith.constant 0 : i32
    %c0_i32_1 = arith.constant 0 : i32
    return %c0_i32, %c0_i32_0 : i32, i32
  }
  func.func @transform_6(%arg0: i32) -> (i32, i32) {
    %c0_i32 = arith.constant 0 : i32
    %c0_i32_0 = arith.constant 0 : i32
    %c0_i32_1 = arith.constant 0 : i32
    return %c0_i32, %c0_i32_0 : i32, i32
  }
  func.func @transform_7(%arg0: i32) -> (i32, i32) {
    %c0_i32 = arith.constant 0 : i32
    %c0_i32_0 = arith.constant 0 : i32
    %c0_i32_1 = arith.constant 0 : i32
    return %c0_i32, %c0_i32_0 : i32, i32
  }
  func.func @transform_8(%arg0: i32) -> (i32, i32) {
    %c0_i32 = arith.constant 0 : i32
    %c0_i32_0 = arith.constant 0 : i32
    %c0_i32_1 = arith.constant 0 : i32
    return %c0_i32, %c0_i32_0 : i32, i32
  }
  func.func @transform_9(%arg0: i32) -> (i32, i32) {
    %c0_i32 = arith.constant 0 : i32
    %c0_i32_0 = arith.constant 0 : i32
    return %arg0, %c0_i32 : i32, i32
  }
}

</mosaic_0001>

<llo_original>
// kernel: critic_forward.1
$region0: #{critic_forward.1}
  #allocation0 [shape = 'u32[]', space=smem, size = 0x4, offset = 0x4, fixed_abs, tag = 'smem constant byte address 0x4 - core index']
  #allocation1 [shape = 'u32[144,128]{1,0:T(1,128)}', space=vmem, size = 0x12000, scoped, tag = 'internal scratch']
  #allocation2 [shape = 'f32[1,1]{1,0:T(1,128)S(1)}', space=vmem, size = 0x200, scoped, tag = 'scoped memory for critic_forward.1']
  %s0 = inlined_call_operand.vmem [shape: f32[8,16], index: 0, kind: input, shape index: {}]
  %s1 = inlined_call_operand.vmem [shape: f32[8,8], index: 1, kind: input, shape index: {}]
  %s2 = inlined_call_operand.vmem [shape: bf16[16,256], index: 2, kind: input, shape index: {}]
  %s3 = inlined_call_operand.vmem [shape: bf16[8,256], index: 3, kind: input, shape index: {}]
  %s4 = inlined_call_operand.vmem [shape: f32[1,256], index: 4, kind: input, shape index: {}]
  %s5 = inlined_call_operand.hbm [shape: bf16[256,128], index: 5, kind: input, shape index: {}]
  %s6 = inlined_call_operand.vmem [shape: f32[1,128], index: 6, kind: input, shape index: {}]
  %s7 = inlined_call_operand.vmem [shape: f32[1,128], index: 7, kind: input, shape index: {}]
  %s8 = inlined_call_operand.<no memory space> [shape: f32[1,1], index: 8, kind: input, shape index: {}]
  %s9 = inlined_call_operand.vmem [shape: f32[8,1], index: 9, kind: output, shape index: {}]
  %s10 = sld [smem:[#allocation0]]
  $region50: #{critic_forward.1} parent=0
    _
  %s12 = ssub.s32 1, %s10
  %s13 = scalar_select 0, %s12, %s10
  %v14 = vstv %s8
  %15 = vst [vmem:[#allocation2] sm:$0x1] %v14
  $region1: #{critic_forward.1} parent=0
    #allocation3 [shape = 'u8[65536]{0}', space=vmem, size = 0x10000, scoped, tag = 'input window, operand 5, single buffered']
    #allocation4 [shape = 's32[1]{0}', space=sflag, size = 0x4, scoped, tag = 'scoped memory for critic_forward.1']
    %16 = vsyncpa [#allocation4], 0
    // Predicated region
    $region2: #{critic_forward.1} parent=1 // pred_check
      _
    $region3: #{critic_forward.1} parent=1 // pred_check_branch
      %18 = sbr.rel (0) target = $region5
    $region4: #{critic_forward.1} parent=1 // pred_region
      _
    $region5: #{critic_forward.1} parent=1 // pred_fallthru
      _
    // Predicated region
    $region6: #{critic_forward.1} parent=1 // pred_check
      _
    $region7: #{critic_forward.1} parent=1 // pred_check_branch
      %20 = sbr.rel (0) target = $region9
    $region8: #{critic_forward.1} parent=1 // pred_region
      _
    $region9: #{critic_forward.1} parent=1 // pred_fallthru
      _
    // Predicated region
    $region10: #{critic_forward.1} parent=1 // pred_check
      _
    $region11: #{critic_forward.1} parent=1 // pred_check_branch
      %22 = sbr.rel (0) target = $region13
    $region12: #{critic_forward.1} parent=1 // pred_region
      _
    $region13: #{critic_forward.1} parent=1 // pred_fallthru
      _
    // Predicated region
    $region14: #{critic_forward.1} parent=1 // pred_check
      _
    $region15: #{critic_forward.1} parent=1 // pred_check_branch
      %24 = sbr.rel (0) target = $region17
    $region16: #{critic_forward.1} parent=1 // pred_region
      _
    $region17: #{critic_forward.1} parent=1 // pred_fallthru
      _
    // Predicated region
    $region18: #{critic_forward.1} parent=1 // pred_check
      _
    $region19: #{critic_forward.1} parent=1 // pred_check_branch
      %26 = sbr.rel (0) target = $region21
    $region20: #{critic_forward.1} parent=1 // pred_region
      _
    $region21: #{critic_forward.1} parent=1 // pred_fallthru
      _
    // Predicated region
    $region22: #{critic_forward.1} parent=1 // pred_check
      _
    $region23: #{critic_forward.1} parent=1 // pred_check_branch
      %28 = sbr.rel (0) target = $region25
    $region24: #{critic_forward.1} parent=1 // pred_region
      %s30 = ssub.s32 2048, 2048
      %31 = vsyncadd [#allocation4], %s30
      %s32 = sshll.u32 [#allocation3], 4
      %s33 = int_to_ptr.vmem [resolvable:$true] %s32
      %38 = dma.hbm_to_vmem [thread:$0]  %s5, 2048, %s33, [#allocation4], 64, 64, 4
    $region25: #{critic_forward.1} parent=1 // pred_fallthru
      _
    // Predicated region
    $region26: #{critic_forward.1} parent=1 // pred_check
      _
    $region27: #{critic_forward.1} parent=1 // pred_check_branch
      %40 = sbr.rel (0) target = $region29
    $region28: #{critic_forward.1} parent=1 // pred_region
      _
    $region29: #{critic_forward.1} parent=1 // pred_fallthru
      _
    // Predicated region
    $region30: #{critic_forward.1} parent=1 // pred_check
      _
    $region31: #{critic_forward.1} parent=1 // pred_check_branch
      %42 = sbr.rel (0) target = $region33
    $region32: #{critic_forward.1} parent=1 // pred_region
      _
    $region33: #{critic_forward.1} parent=1 // pred_fallthru
      _
    // Predicated region
    $region34: #{critic_forward.1} parent=1 // pred_check
      _
    $region35: #{critic_forward.1} parent=1 // pred_check_branch
      %44 = sbr.rel (0) target = $region37
    $region36: #{critic_forward.1} parent=1 // pred_region
      _
    $region37: #{critic_forward.1} parent=1 // pred_fallthru
      _
    // Predicated region
    $region38: #{critic_forward.1} parent=1 // pred_check
      _
    $region39: #{critic_forward.1} parent=1 // pred_check_branch
      %46 = sbr.rel (0) target = $region41
    $region40: #{critic_forward.1} parent=1 // pred_region
      %47 = dma.done [#allocation4], 2048
    $region41: #{critic_forward.1} parent=1 // pred_fallthru
      _
    %v49 = vld [vmem:[%s0] sm:$0xff]
    %v50 = vpack.c.bf16 %v49, %v49
    %v51 = vld [vmem:[%s1] sm:$0xff]
    %v52 = vpack.c.bf16 %v51, %v51
    %v53 = vld [vmem:[%s2] sm:$0xff]
    %v54 = vld [vmem:[%s2 + $0x8] sm:$0xff]
    %v55 = vld [vmem:[%s3] sm:$0xff]
    %v57 = vunpack.c.l.b16 %v55
    %v58 = vunpack.c.h.b16 %v55
    %v59 = vpack.c.b16 %v57, %v57
    %v60 = vpack.c.b16 %v58, %v58
    %vm61 = vcmask 64512
    %v63 = vsel %vm61, %v52, 0
    %vm65 = vcmask 1043456
    %v67 = vsel %vm65, %v59, 0
    %v70 = vsel %vm65, %v60, 0
    %72 = vmatprep.subr.bf16.mxu0 %v70
    %73 = vmatpush1.bf16.msra.mxu0 %v67
    %74 = vmatprep.subr.bf16.mxu0 0
    %75 = vmatpush1.bf16.msra.mxu0 0
    %76 = vmatprep.subr.bf16.mxu0 0
    %77 = vmatpush1.bf16.msra.mxu0 0
    %78 = vmatprep.subr.bf16.mxu0 0
    %79 = vmatpush1.bf16.msra.mxu0 0
    %80 = vmatprep.subr.bf16.mxu0 0
    %81 = vmatpush1.bf16.msra.mxu0 0
    %82 = vmatprep.subr.bf16.mxu0 0
    %83 = vmatpush1.bf16.msra.mxu0 0
    %84 = vmatprep.subr.bf16.mxu0 0
    %85 = vmatpush1.bf16.msra.mxu0 0
    %86 = vmatprep.subr.bf16.mxu0 0
    %87 = vmatpush1.bf16.msra.mxu0 0
    %88 = vmatprep.subr.bf16.mxu0 0
    %89 = vmatpush1.bf16.msra.mxu0 0
    %90 = vmatprep.subr.bf16.mxu0 0
    %91 = vmatpush1.bf16.msra.mxu0 0
    %92 = vmatprep.subr.bf16.mxu0 0
    %93 = vmatpush1.bf16.msra.mxu0 0
    %94 = vmatprep.subr.bf16.mxu0 0
    %95 = vmatpush1.bf16.msra.mxu0 0
    %96 = vmatprep.subr.bf16.mxu0 0
    %97 = vmatpush1.bf16.msra.mxu0 0
    %98 = vmatprep.subr.bf16.mxu0 0
    %99 = vmatpush1.bf16.msra.mxu0 0
    %100 = vmatprep.subr.bf16.mxu0 0
    %101 = vmatpush1.bf16.msra.mxu0 0
    %102 = vmatprep.subr.bf16.mxu0 0
    %103 = vmatpush1.bf16.msra.mxu0 0
    %104 = vmatprep.mubr.bf16.mxu0 0
    %105 = vmatmul.mubr.bf16.gmra.mrb[0].mxu0 %v63
    %v106 = vpop.f32.mrb[0].mxu0
    %v107 = vadd.f32 0.0, %v106
    %v108 = vpop.f32.mrb[0].mxu0
    %v109 = vadd.f32 0.0, %v108
    %v110 = vpop.f32.mrb[0].mxu0
    %v111 = vpop.f32.mrb[0].mxu0
    %112 = vdwg.mxu0
    %v115 = vunpack.c.l.b16 %v53
    %v116 = vunpack.c.h.b16 %v53
    %v117 = vunpack.c.l.b16 %v54
    %v118 = vunpack.c.h.b16 %v54
    %v119 = vpack.c.b16 %v117, %v115
    %v120 = vpack.c.b16 %v118, %v116
    %vm123 = vcmask 130048
    %v125 = vsel %vm123, %v50, 0
    %127 = vmatprep.subr.bf16.mxu0 %v120
    %128 = vmatpush1.bf16.msra.mxu0 %v119
    %129 = vmatprep.subr.bf16.mxu0 0
    %130 = vmatpush1.bf16.msra.mxu0 0
    %131 = vmatprep.subr.bf16.mxu0 0
    %132 = vmatpush1.bf16.msra.mxu0 0
    %133 = vmatprep.subr.bf16.mxu0 0
    %134 = vmatpush1.bf16.msra.mxu0 0
    %135 = vmatprep.subr.bf16.mxu0 0
    %136 = vmatpush1.bf16.msra.mxu0 0
    %137 = vmatprep.subr.bf16.mxu0 0
    %138 = vmatpush1.bf16.msra.mxu0 0
    %139 = vmatprep.subr.bf16.mxu0 0
    %140 = vmatpush1.bf16.msra.mxu0 0
    %141 = vmatprep.subr.bf16.mxu0 0
    %142 = vmatpush1.bf16.msra.mxu0 0
    %143 = vmatprep.subr.bf16.mxu0 0
    %144 = vmatpush1.bf16.msra.mxu0 0
    %145 = vmatprep.subr.bf16.mxu0 0
    %146 = vmatpush1.bf16.msra.mxu0 0
    %147 = vmatprep.subr.bf16.mxu0 0
    %148 = vmatpush1.bf16.msra.mxu0 0
    %149 = vmatprep.subr.bf16.mxu0 0
    %150 = vmatpush1.bf16.msra.mxu0 0
    %151 = vmatprep.subr.bf16.mxu0 0
    %152 = vmatpush1.bf16.msra.mxu0 0
    %153 = vmatprep.subr.bf16.mxu0 0
    %154 = vmatpush1.bf16.msra.mxu0 0
    %155 = vmatprep.subr.bf16.mxu0 0
    %156 = vmatpush1.bf16.msra.mxu0 0
    %157 = vmatprep.subr.bf16.mxu0 0
    %158 = vmatpush1.bf16.msra.mxu0 0
    %159 = vmatprep.mubr.bf16.mxu0 0
    %160 = vmatmul.mubr.bf16.gmra.mrb[0].mxu0 %v125
    %v161 = vpop.f32.mrb[0].mxu0
    %v162 = vadd.f32 %v107, %v161
    %v163 = vpop.f32.mrb[0].mxu0
    %v164 = vadd.f32 %v109, %v163
    %v165 = vpop.f32.mrb[0].mxu0
    %v166 = vpop.f32.mrb[0].mxu0
    %167 = vdwg.mxu0
    %v168 = vld [vmem:[%s4] sm:$0x3]
    %v170 = vlaneseq
    %v171 = vshrl.u32 %v170, 7
    %v172 = vsub.s32 0, %v171
    %v173 = vrot.slane %v168, %v172
    %v174 = vlaneseq
    %v175 = vshrl.u32 %v174, 7
    %v176 = vsub.s32 1, %v175
    %v177 = vrot.slane %v168, %v176
    %v180 = vadd.f32 %v162, %v173
    %v181 = vadd.f32 %v164, %v177
    %v182 = vmul.f32 %v180, 0.01
    %v183 = vmul.f32 %v181, 0.01
    %v184 = vmax.f32 %v180, %v182
    %v185 = vmax.f32 %v181, %v183
    %v186 = vpack.c.bf16 %v184, %v184
    %v187 = vpack.c.bf16 %v185, %v185
    %v188 = vld [vmem:[#allocation3] sm:$0xf]
    %v189 = vld [vmem:[#allocation3 + $0x4] sm:$0xf]
    %v190 = vld [vmem:[#allocation3 + $0x8] sm:$0xf]
    %v191 = vld [vmem:[#allocation3 + $0xc] sm:$0xf]
    %v192 = vld [vmem:[#allocation3 + $0x10] sm:$0xf]
    %v193 = vld [vmem:[#allocation3 + $0x14] sm:$0xf]
    %v194 = vld [vmem:[#allocation3 + $0x18] sm:$0xf]
    %v195 = vld [vmem:[#allocation3 + $0x1c] sm:$0xf]
    %v196 = vld [vmem:[#allocation3 + $0x20] sm:$0xf]
    %v197 = vld [vmem:[#allocation3 + $0x24] sm:$0xf]
    %v198 = vld [vmem:[#allocation3 + $0x28] sm:$0xf]
    %v199 = vld [vmem:[#allocation3 + $0x2c] sm:$0xf]
    %v200 = vld [vmem:[#allocation3 + $0x30] sm:$0xf]
    %v201 = vld [vmem:[#allocation3 + $0x34] sm:$0xf]
    %v202 = vld [vmem:[#allocation3 + $0x38] sm:$0xf]
    %v203 = vld [vmem:[#allocation3 + $0x3c] sm:$0xf]
    %v204 = vld [vmem:[#allocation3 + $0x40] sm:$0xf]
    %v205 = vld [vmem:[#allocation3 + $0x44] sm:$0xf]
    %v206 = vld [vmem:[#allocation3 + $0x48] sm:$0xf]
    %v207 = vld [vmem:[#allocation3 + $0x4c] sm:$0xf]
    %v208 = vld [vmem:[#allocation3 + $0x50] sm:$0xf]
    %v209 = vld [vmem:[#allocation3 + $0x54] sm:$0xf]
    %v210 = vld [vmem:[#allocation3 + $0x58] sm:$0xf]
    %v211 = vld [vmem:[#allocation3 + $0x5c] sm:$0xf]
    %v212 = vld [vmem:[#allocation3 + $0x60] sm:$0xf]
    %v213 = vld [vmem:[#allocation3 + $0x64] sm:$0xf]
    %v214 = vld [vmem:[#allocation3 + $0x68] sm:$0xf]
    %v215 = vld [vmem:[#allocation3 + $0x6c] sm:$0xf]
    %v216 = vld [vmem:[#allocation3 + $0x70] sm:$0xf]
    %v217 = vld [vmem:[#allocation3 + $0x74] sm:$0xf]
    %v218 = vld [vmem:[#allocation3 + $0x78] sm:$0xf]
    %v219 = vld [vmem:[#allocation3 + $0x7c] sm:$0xf]
    %v220 = vld [vmem:[%s6] sm:$0x1]
    %v222 = vlaneseq
    %v223 = vshrl.u32 %v222, 7
    %v224 = vsub.s32 0, %v223
    %v225 = vrot.slane %v220, %v224
    %v259 = vunpack.c.l.b16 %v188
    %v260 = vunpack.c.l.b16 %v189
    %v261 = vunpack.c.l.b16 %v190
    %v262 = vunpack.c.l.b16 %v191
    %v263 = vunpack.c.l.b16 %v192
    %v264 = vunpack.c.l.b16 %v193
    %v265 = vunpack.c.l.b16 %v194
    %v266 = vunpack.c.l.b16 %v195
    %v267 = vunpack.c.l.b16 %v196
    %v268 = vunpack.c.l.b16 %v197
    %v269 = vunpack.c.l.b16 %v198
    %v270 = vunpack.c.l.b16 %v199
    %v271 = vunpack.c.l.b16 %v200
    %v272 = vunpack.c.l.b16 %v201
    %v273 = vunpack.c.l.b16 %v202
    %v274 = vunpack.c.l.b16 %v203
    %v275 = vunpack.c.l.b16 %v204
    %v276 = vunpack.c.l.b16 %v205
    %v277 = vunpack.c.l.b16 %v206
    %v278 = vunpack.c.l.b16 %v207
    %v279 = vunpack.c.l.b16 %v208
    %v280 = vunpack.c.l.b16 %v209
    %v281 = vunpack.c.l.b16 %v210
    %v282 = vunpack.c.l.b16 %v211
    %v283 = vunpack.c.l.b16 %v212
    %v284 = vunpack.c.l.b16 %v213
    %v285 = vunpack.c.l.b16 %v214
    %v286 = vunpack.c.l.b16 %v215
    %v287 = vunpack.c.l.b16 %v216
    %v288 = vunpack.c.l.b16 %v217
    %v289 = vunpack.c.l.b16 %v218
    %v290 = vunpack.c.l.b16 %v219
    %v291 = vpack.c.b16 %v260, %v259
    %v292 = vpack.c.b16 %v262, %v261
    %v293 = vpack.c.b16 %v264, %v263
    %v294 = vpack.c.b16 %v266, %v265
    %v295 = vpack.c.b16 %v268, %v267
    %v296 = vpack.c.b16 %v270, %v269
    %v297 = vpack.c.b16 %v272, %v271
    %v298 = vpack.c.b16 %v274, %v273
    %v299 = vpack.c.b16 %v276, %v275
    %v300 = vpack.c.b16 %v278, %v277
    %v301 = vpack.c.b16 %v280, %v279
    %v302 = vpack.c.b16 %v282, %v281
    %v303 = vpack.c.b16 %v284, %v283
    %v304 = vpack.c.b16 %v286, %v285
    %v305 = vpack.c.b16 %v288, %v287
    %v306 = vpack.c.b16 %v290, %v289
    %323 = vmatprep.subr.bf16.mxu0 0
    %324 = vmatpush1.bf16.msra.mxu0 %v291
    %325 = vmatprep.subr.bf16.mxu0 0
    %326 = vmatpush1.bf16.msra.mxu0 %v292
    %327 = vmatprep.subr.bf16.mxu0 0
    %328 = vmatpush1.bf16.msra.mxu0 %v293
    %329 = vmatprep.subr.bf16.mxu0 0
    %330 = vmatpush1.bf16.msra.mxu0 %v294
    %331 = vmatprep.subr.bf16.mxu0 0
    %332 = vmatpush1.bf16.msra.mxu0 %v295
    %333 = vmatprep.subr.bf16.mxu0 0
    %334 = vmatpush1.bf16.msra.mxu0 %v296
    %335 = vmatprep.subr.bf16.mxu0 0
    %336 = vmatpush1.bf16.msra.mxu0 %v297
    %337 = vmatprep.subr.bf16.mxu0 0
    %338 = vmatpush1.bf16.msra.mxu0 %v298
    %339 = vmatprep.subr.bf16.mxu0 0
    %340 = vmatpush1.bf16.msra.mxu0 %v299
    %341 = vmatprep.subr.bf16.mxu0 0
    %342 = vmatpush1.bf16.msra.mxu0 %v300
    %343 = vmatprep.subr.bf16.mxu0 0
    %344 = vmatpush1.bf16.msra.mxu0 %v301
    %345 = vmatprep.subr.bf16.mxu0 0
    %346 = vmatpush1.bf16.msra.mxu0 %v302
    %347 = vmatprep.subr.bf16.mxu0 0
    %348 = vmatpush1.bf16.msra.mxu0 %v303
    %349 = vmatprep.subr.bf16.mxu0 0
    %350 = vmatpush1.bf16.msra.mxu0 %v304
    %351 = vmatprep.subr.bf16.mxu0 0
    %352 = vmatpush1.bf16.msra.mxu0 %v305
    %353 = vmatprep.subr.bf16.mxu0 0
    %354 = vmatpush1.bf16.msra.mxu0 %v306
    %355 = vmatprep.mubr.bf16.mxu0 %v187
    %356 = vmatmul.mubr.bf16.gmra.mrb[0].mxu0 %v186
    %v357 = vpop.f32.mrb[0].mxu0
    %v358 = vadd.f32 %v225, %v357
    %v359 = vpop.f32.mrb[0].mxu0
    %v360 = vpop.f32.mrb[0].mxu0
    %v361 = vpop.f32.mrb[0].mxu0
    %362 = vdwg.mxu0
    %v363 = vmul.f32 %v358, 0.01
    %v364 = vmax.f32 %v358, %v363
    %v365 = vld [vmem:[%s7] sm:$0x1]
    %v367 = vlaneseq
    %v368 = vshrl.u32 %v367, 7
    %v369 = vsub.s32 0, %v368
    %v370 = vrot.slane %v365, %v369
    %v372 = vmul.f32 %v364, %v370
    %373 = vadd.xlane.f32.xlu0 %v372
    %v374 = vpop.xlane.xlu0 %373
    %v375 = vld [vmem:[#allocation2] sm:$0x1]
    %v377 = vlaneseq
    %v378 = vshrl.u32 %v377, 7
    %v379 = vsub.s32 0, %v378
    %v380 = vrot.slane %v375, %v379
    %v382 = vadd.f32 %v374, %v380
    %vm383 = vcmask 7168
    %384 = vst.msk [vmem:[%s9] sm:$0xff] %vm383, %v382
    // Predicated region
    $region42: #{critic_forward.1} parent=1 // pred_check
      _
    $region43: #{critic_forward.1} parent=1 // pred_check_branch
      %386 = sbr.rel (0) target = $region45
    $region44: #{critic_forward.1} parent=1 // pred_region
      _
    $region45: #{critic_forward.1} parent=1 // pred_fallthru
      _
    // Predicated region
    $region46: #{critic_forward.1} parent=1 // pred_check
      _
    $region47: #{critic_forward.1} parent=1 // pred_check_branch
      %388 = sbr.rel (0) target = $region49
    $region48: #{critic_forward.1} parent=1 // pred_region
      _
    $region49: #{critic_forward.1} parent=1 // pred_fallthru
      _
    %389 = vsyncpa [#allocation4], 1

</llo_original>
